<compile_context>
chip_gen: v7x
topology: tpu7x:2x2x1
jax: 0.10.0
libtpu: 0.0.40
codegen_flags: <defaults>
</compile_context>

<pallas_src>
import math

import jax
import jax.numpy as jnp
from jax.experimental import pallas as pl
from jax.experimental.pallas import tpu as pltpu


def _build_pe(d_model: int, seq_len: int) -> jnp.ndarray:
    """Vectorized replication of the PyTorch __init__ pe table (float32).

    For column j (0-based):
      even j:  sin(pos / 10000 ** (2*j / d_model))
      odd  j:  cos(pos / 10000 ** (2*j / d_model))
    which matches the module's loop (its odd column uses exponent 2*(i+1)/d_model
    with j = i+1).
    """
    full_len = seq_len * 2
    pos = jnp.arange(full_len, dtype=jnp.float32)[:, None]          # (2*seq_len, 1)
    col = jnp.arange(d_model, dtype=jnp.float32)[None, :]           # (1, d_model)
    denom = jnp.power(jnp.float32(10000.0), 2.0 * col / d_model)    # (1, d_model)
    angle = pos / denom                                              # (2*seq_len, d_model)
    is_even = (jnp.arange(d_model)[None, :] % 2) == 0
    pe = jnp.where(is_even, jnp.sin(angle), jnp.cos(angle))
    return pe[None, :, :].astype(jnp.float32)                        # (1, 2*seq_len, d_model)


def _round_up(a: int, b: int) -> int:
    return ((a + b - 1) // b) * b


def _sublane_multiple(dtype) -> int:
    itemsize = jnp.dtype(dtype).itemsize
    return {4: 8, 2: 16, 1: 32}.get(itemsize, 8)


def _pe_kernel_factory(scale: float):
    def pe_kernel(x_ref, pe_ref, o_ref):
        # x_ref: (tb, tsd) rows of the flattened batch; pe_ref: (1, tsd) tile
        # (sublane broadcast of pe is free under DMA).  Explicit cast keeps
        # bf16/f16 stores well-defined.
        o_ref[...] = (x_ref[...] * scale + pe_ref[...]).astype(o_ref.dtype)
    return pe_kernel


def positional_encoding_forward(
    x: jnp.ndarray,
    pe: jnp.ndarray,
    d_model: int,
    *,
    target_block_bytes: int = 4 * 1024 * 1024,
) -> jnp.ndarray:
    """x: (B, S, D), pe: (1, S, D).  Returns x * sqrt(d_model) + pe, shape (B, S, D)."""
    B, S, D = x.shape
    assert pe.shape[0] == 1 and pe.shape[2] == D
    # Module contract: forward adds the full pe table, so x's sequence length
    # must equal 2*seq_len (same requirement as torch broadcasting).
    assert pe.shape[1] == S, "x sequence length must match the pe table (2*seq_len)"
    scale = math.sqrt(d_model)

    SD = S * D
    itemsize = jnp.dtype(x.dtype).itemsize
    sublane = _sublane_multiple(x.dtype)
    LANE = 128

    # Lane-dense 2D layout; pe cast to x.dtype (halves pe DMA for bf16, keeps
    # the add on packed vregs, avoids implicit f32->bf16 store).
    x2 = x.reshape(B, SD)
    pe2 = pe.reshape(1, SD).astype(x.dtype)

    # --- lane (SD) tile: multiple of 128, capped so that a sublane-group of rows
    #     stays within the block budget (never forces an over-budget block). ---
    lane_budget_bytes = max(LANE * itemsize, target_block_bytes // sublane)
    if SD * itemsize <= lane_budget_bytes:
        tsd = SD
    else:
        tsd = max(LANE, ((lane_budget_bytes // itemsize) // LANE) * LANE)

    # --- batch tile: fill the remaining budget, rounded to the sublane multiple.
    #     Because tsd honors the budget above, this can never exceed it. ---
    row_block_bytes = tsd * itemsize
    tb_budget = max(1, target_block_bytes // row_block_bytes)
    if tb_budget >= B:
        tb = B
    else:
        tb = max(sublane, (tb_budget // sublane) * sublane)

    # --- v7x megacore: keep >=2 grid steps for non-trivial inputs so the
    #     'parallel' axes can shard across both TensorCores. ---
    total_bytes = B * SD * itemsize
    if total_bytes > (1 << 20) and pl.cdiv(B, tb) * pl.cdiv(SD, tsd) < 2:
        if B >= 2 * sublane:
            cand = _round_up(pl.cdiv(B, 4), sublane)
            if cand >= B:
                cand = _round_up(pl.cdiv(B, 2), sublane)
            if cand < B:
                tb = min(tb, cand)
        elif SD >= 2 * LANE:
            cand = _round_up(pl.cdiv(SD, 4), LANE)
            if cand >= SD:
                cand = _round_up(pl.cdiv(SD, 2), LANE)
            if cand < SD:
                tsd = min(tsd, cand)

    grid = (pl.cdiv(B, tb), pl.cdiv(SD, tsd))
    kernel = _pe_kernel_factory(scale)

    out2 = pl.pallas_call(
        kernel,
        out_shape=jax.ShapeDtypeStruct((B, SD), x.dtype),
        grid_spec=pl.GridSpec(
            grid=grid,
            in_specs=[
                pl.BlockSpec((tb, tsd), lambda i, j: (i, j)),   # x tile
                pl.BlockSpec((1, tsd), lambda i, j: (0, j)),    # pe tile (batch-invariant)
            ],
            out_specs=pl.BlockSpec((tb, tsd), lambda i, j: (i, j)),
        ),
        compiler_params=pltpu.CompilerParams(
            dimension_semantics=("parallel", "parallel"),       # no reduction axes
            vmem_limit_bytes=32 * 1024 * 1024,                  # safe on v5e/v6e/v7x
        ),
    )(x2, pe2)

    return out2.reshape(B, S, D)


if __name__ == "__main__":
    # Small shapes consistent with the module: d_model=32, seq_len=8 -> S=16.
    d_model = 32
    seq_len = 8
    batch = 2
    S = seq_len * 2

    key = jax.random.PRNGKey(0)
    x = jax.random.normal(key, (batch, S, d_model), dtype=jnp.float32)

    pe = _build_pe(d_model, seq_len)  # deterministic buffer init

    out = positional_encoding_forward(x, pe, d_model)
    out = jax.block_until_ready(out)

    # Reference check in plain JAX (same semantics as the PyTorch forward).
    ref = x * math.sqrt(d_model) + pe
    assert out.shape == (batch, S, d_model)
    assert jnp.allclose(out, ref, atol=1e-5, rtol=1e-5)

    print("KERNEL_OK")
</pallas_src>

<mosaic_0001>
module attributes {stable_mosaic.version = 11 : i64} {
  func.func @pe_kernel(%arg0: i32, %arg1: i32, %arg2: memref<2x512xf32, #tpu.memory_space<vmem>>, %arg3: memref<1x512xf32, #tpu.memory_space<vmem>>, %arg4: memref<2x512xf32, #tpu.memory_space<vmem>>) attributes {dimension_semantics = [#tpu.dimension_semantics<parallel>, #tpu.dimension_semantics<parallel>], iteration_bounds = array<i64: 1, 1>, scalar_prefetch = 0 : i64, scratch_operands = 0 : i64, tpu.core_type = #tpu.core_type<tc>, window_params = [{transform_indices = @transform_0, window_bounds = array<i64: 2, 512>}, {transform_indices = @transform_1, window_bounds = array<i64: 1, 512>}, {transform_indices = @transform_2, window_bounds = array<i64: 2, 512>}]} {
    %c0 = arith.constant 0 : index
    %c0_0 = arith.constant 0 : index
    %0 = vector.load %arg2[%c0, %c0_0] : memref<2x512xf32, #tpu.memory_space<vmem>>, vector<2x512xf32>
    %cst = arith.constant 5.65685415 : f32
    %1 = vector.broadcast %cst : f32 to vector<2x512xf32>
    %2 = arith.mulf %0, %1 : vector<2x512xf32>
    %c0_1 = arith.constant 0 : index
    %c0_2 = arith.constant 0 : index
    %3 = vector.load %arg3[%c0_1, %c0_2] : memref<1x512xf32, #tpu.memory_space<vmem>>, vector<1x512xf32>
    %4 = vector.broadcast %3 : vector<1x512xf32> to vector<2x512xf32>
    %5 = arith.addf %2, %4 : vector<2x512xf32>
    %c0_3 = arith.constant 0 : index
    %c0_4 = arith.constant 0 : index
    %6 = vector.load %arg4[%c0_3, %c0_4] : memref<2x512xf32, #tpu.memory_space<vmem>>, vector<2x512xf32>
    tpu.vector_store %arg4[%c0_3, %c0_4], %5 {strides = array<i32>} : memref<2x512xf32, #tpu.memory_space<vmem>>, vector<2x512xf32>,
    return
  }
  func.func @transform_0(%arg0: i32, %arg1: i32) -> (i32, i32) {
    %c0_i32 = arith.constant 0 : i32
    return %arg0, %arg1 : i32, i32
  }
  func.func @transform_1(%arg0: i32, %arg1: i32) -> (i32, i32) {
    %c0_i32 = arith.constant 0 : i32
    %c0_i32_0 = arith.constant 0 : i32
    return %c0_i32, %arg1 : i32, i32
  }
  func.func @transform_2(%arg0: i32, %arg1: i32) -> (i32, i32) {
    %c0_i32 = arith.constant 0 : i32
    return %arg0, %arg1 : i32, i32
  }
}

</mosaic_0001>

<llo_original>
// kernel: tpu_custom_call.1
$region0: #{tpu_custom_call.1}
  #allocation0 [shape = 'u32[]', space=smem, size = 0x4, offset = 0x4, fixed_abs, tag = 'smem constant byte address 0x4 - core index']
  #allocation1 [shape = 'u32[144,128]{1,0:T(1,128)}', space=vmem, size = 0x12000, scoped, tag = 'internal scratch']
  %s0 = inlined_call_operand.hbm [shape: f32[2,512], index: 0, kind: input, shape index: {}]
  %s1 = inlined_call_operand.hbm [shape: f32[1,512], index: 1, kind: input, shape index: {}]
  %s2 = inlined_call_operand.hbm [shape: f32[2,512], index: 2, kind: output, shape index: {}]
  %s3 = sld [smem:[#allocation0]]
  $region26: #{tpu_custom_call.1} parent=0
    _
  %s5 = ssub.s32 1, %s3
  %s6 = scalar_select 0, %s5, %s3
  $region1: #{tpu_custom_call.1} parent=0
    #allocation2 [shape = 'u8[4096]{0}', space=vmem, size = 0x1000, scoped, tag = 'input window, operand 0, single buffered']
    #allocation3 [shape = 's32[1]{0}', space=sflag, size = 0x4, scoped, tag = 'scoped memory for tpu_custom_call.1']
    #allocation4 [shape = 's32[1]{0}', space=sflag, size = 0x4, scoped, tag = 'scoped memory for tpu_custom_call.1']
    #allocation5 [shape = 'u8[2048]{0}', space=vmem, size = 0x800, scoped, tag = 'input window, operand 1, single buffered']
    #allocation6 [shape = 's32[1]{0}', space=sflag, size = 0x4, scoped, tag = 'scoped memory for tpu_custom_call.1']
    #allocation7 [shape = 'u8[4096]{0}', space=vmem, size = 0x1000, scoped, tag = 'output window, operand 0, single buffered']
    %7 = vsyncpa [#allocation3], 0
    %8 = vsyncpa [#allocation6], 0
    %9 = vsyncpa [#allocation4], 0
    // Predicated region
    $region2: #{tpu_custom_call.1} parent=1 // pred_check
      _
    $region3: #{tpu_custom_call.1} parent=1 // pred_check_branch
      %11 = sbr.rel (0) target = $region5
    $region4: #{tpu_custom_call.1} parent=1 // pred_region
      %s13 = ssub.s32 128, 128
      %14 = vsyncadd [#allocation3], %s13
      %s16 = sshll.u32 [#allocation2], 4
      %s17 = int_to_ptr.vmem [resolvable:$true] %s16
      %19 = dma.hbm_to_vmem [thread:$0]  %s0, 128, %s17, [#allocation3]
    $region5: #{tpu_custom_call.1} parent=1 // pred_fallthru
      _
    // Predicated region
    $region6: #{tpu_custom_call.1} parent=1 // pred_check
      _
    $region7: #{tpu_custom_call.1} parent=1 // pred_check_branch
      %21 = sbr.rel (0) target = $region9
    $region8: #{tpu_custom_call.1} parent=1 // pred_region
      %s23 = ssub.s32 64, 64
      %24 = vsyncadd [#allocation6], %s23
      %s26 = sshll.u32 [#allocation5], 4
      %s27 = int_to_ptr.vmem [resolvable:$true] %s26
      %29 = dma.hbm_to_vmem [thread:$0]  %s1, 64, %s27, [#allocation6]
    $region9: #{tpu_custom_call.1} parent=1 // pred_fallthru
      _
    // Predicated region
    $region10: #{tpu_custom_call.1} parent=1 // pred_check
      _
    $region11: #{tpu_custom_call.1} parent=1 // pred_check_branch
      %31 = sbr.rel (0) target = $region13
    $region12: #{tpu_custom_call.1} parent=1 // pred_region
      %32 = dma.done [#allocation3], 128
    $region13: #{tpu_custom_call.1} parent=1 // pred_fallthru
      _
    // Predicated region
    $region14: #{tpu_custom_call.1} parent=1 // pred_check
      _
    $region15: #{tpu_custom_call.1} parent=1 // pred_check_branch
      %34 = sbr.rel (0) target = $region17
    $region16: #{tpu_custom_call.1} parent=1 // pred_region
      %35 = dma.done [#allocation6], 64
    $region17: #{tpu_custom_call.1} parent=1 // pred_fallthru
      _
    %v36 = vld [vmem:[#allocation2] sm:$0xff]
    %v37 = vmul.f32 %v36, 5.656854
    %v38 = vld [vmem:[#allocation5] sm:$0xf]
    %v40 = vlaneseq
    %v41 = vshrl.u32 %v40, 7
    %v42 = vsub.s32 0, %v41
    %v43 = vrot.slane %v38, %v42
    %v44 = vlaneseq
    %v45 = vshrl.u32 %v44, 7
    %v46 = vsub.s32 1, %v45
    %v47 = vrot.slane %v38, %v46
    %v48 = vlaneseq
    %v49 = vshrl.u32 %v48, 7
    %v50 = vsub.s32 2, %v49
    %v51 = vrot.slane %v38, %v50
    %v52 = vlaneseq
    %v53 = vshrl.u32 %v52, 7
    %v54 = vsub.s32 3, %v53
    %v55 = vrot.slane %v38, %v54
    %v56 = vcombine.low %v43, %v47
    %v57 = vcombine.low %v51, %v55
    %v59 = vunpack.c.l.s4 1983009808
    %v60 = vunpack.c.0.s8 %v59
    %v61 = vlaneseq
    %v62 = vshrl.u32 %v61, 7
    %v63 = vsub.s32 %v60, %v62
    %v64 = vrot.slane %v56, %v63
    %v66 = vunpack.c.l.s4 1983009808
    %v67 = vunpack.c.0.s8 %v66
    %v68 = vlaneseq
    %v69 = vshrl.u32 %v68, 7
    %v70 = vsub.s32 %v67, %v69
    %v71 = vrot.slane %v57, %v70
    %v72 = vcombine.low %v64, %v71
    %v74 = vadd.f32 %v37, %v72
    %75 = vst [vmem:[#allocation7] sm:$0xff] %v74
    // Predicated region
    $region18: #{tpu_custom_call.1} parent=1 // pred_check
      _
    $region19: #{tpu_custom_call.1} parent=1 // pred_check_branch
      %77 = sbr.rel (0) target = $region21
    $region20: #{tpu_custom_call.1} parent=1 // pred_region
      %s79 = ssub.s32 128, 128
      %80 = vsyncadd [#allocation4], %s79
      %s82 = sshll.u32 [#allocation7], 4
      %s83 = int_to_ptr.vmem [resolvable:$true] %s82
      %85 = dma.vmem_to_hbm [thread:$0]  %s83, 128, %s2, [#allocation4]
    $region21: #{tpu_custom_call.1} parent=1 // pred_fallthru
      _
    // Predicated region
    $region22: #{tpu_custom_call.1} parent=1 // pred_check
      _
    $region23: #{tpu_custom_call.1} parent=1 // pred_check_branch
      %87 = sbr.rel (0) target = $region25
    $region24: #{tpu_custom_call.1} parent=1 // pred_region
      %88 = dma.done [#allocation4], 128
    $region25: #{tpu_custom_call.1} parent=1 // pred_fallthru
      _
    %89 = vsyncpa [#allocation3], 1
    %90 = vsyncpa [#allocation6], 1
    %91 = vsyncpa [#allocation4], 1

</llo_original>
